<compile_context>
chip_gen: v5e
topology: v5e:2x2
jax: 0.10.0
libtpu: 0.0.40
codegen_flags: <defaults>
</compile_context>

<pallas_src>
import jax
import jax.numpy as jnp
from jax import lax
from jax.experimental import pallas as pl
from jax.experimental.pallas import tpu as pltpu


def char_lstm_kernel(gx_ref, h0_ref, c0_ref, whh_ref, wfc_ref, bfc_ref,
                     out_ref, hT_ref, cT_ref, h_all_sc):
    """gx_ref: (B, T, 4H) pre-projected input gates (biases already folded in).
    h0/c0: (1, B, H); whh: (H, 4H); wfc: (H, O); bfc: (1, O).
    Outputs: out (B*T, O) batch-first logits, hT/cT (1, B, H)."""
    B, T, H4 = gx_ref.shape
    H = h0_ref.shape[-1]

    whh = whh_ref[...]            # (H, 4H), stays resident across the loop
    h = h0_ref[0]                 # (B, H)
    c = c0_ref[0]                 # (B, H)

    # Static per-lane constants (hoisted out of the loop; JAX does not CSE
    # broadcast_in_dim, so build them exactly once).
    # Gate lanes 2H..3H are the g-gate (tanh); all other lanes are sigmoid,
    # computed via sigmoid(x) = 0.5 * tanh(0.5 * x) + 0.5 so the whole
    # (B, 4H) row needs only ONE EUP tanh pass per step.
    lane = lax.broadcasted_iota(jnp.int32, (B, H4), 1)
    g_lanes = (lane >= 2 * H) & (lane < 3 * H)
    pre_scale = jnp.where(g_lanes, 1.0, 0.5).astype(jnp.float32)   # input scale
    post_scale = pre_scale                                          # output scale
    post_off = jnp.where(g_lanes, 0.0, 0.5).astype(jnp.float32)    # output offset

    for t in range(T):            # fully unrolled; T is small and static
        # Serial critical path: tiny (B,H)@(H,4H) MXU matmul + one tanh pass.
        gates = gx_ref[:, t, :] + jnp.dot(
            h, whh, preferred_element_type=jnp.float32)             # (B, 4H)
        act = jnp.tanh(gates * pre_scale) * post_scale + post_off   # (B, 4H)
        i_g = act[:, 0 * H:1 * H]
        f_g = act[:, 1 * H:2 * H]
        g_g = act[:, 2 * H:3 * H]
        o_g = act[:, 3 * H:4 * H]
        c = f_g * c + i_g * g_g
        h = o_g * jnp.tanh(c)
        h_all_sc[:, t, :] = h     # resident batch-first slab, VMEM only

    # Deferred FC epilogue: one (B*T, H) @ (H, O) matmul, one store, already
    # in b-major row order (matches PyTorch output.reshape(B*T, O)).
    h_bt = h_all_sc[...].reshape(B * T, H)
    out_ref[...] = (jnp.dot(h_bt, wfc_ref[...],
                            preferred_element_type=jnp.float32)
                    + bfc_ref[...]).astype(out_ref.dtype)

    # Final hidden / cell state, written exactly once.
    hT_ref[0] = h
    cT_ref[0] = c


def char_lstm_pallas(gates_x, h0, c0, whh_t, wfc_t, bfc_2d):
    B, T, _ = gates_x.shape
    H = h0.shape[-1]
    O = wfc_t.shape[-1]

    vmem = pl.BlockSpec(memory_space=pltpu.MemorySpace.VMEM)
    return pl.pallas_call(
        char_lstm_kernel,
        out_shape=(
            jax.ShapeDtypeStruct((B * T, O), jnp.float32),
            jax.ShapeDtypeStruct((1, B, H), jnp.float32),
            jax.ShapeDtypeStruct((1, B, H), jnp.float32),
        ),
        in_specs=[vmem] * 6,
        out_specs=(vmem, vmem, vmem),
        scratch_shapes=[pltpu.VMEM((B, T, H), jnp.float32)],
    )(gates_x, h0, c0, whh_t, wfc_t, bfc_2d)


@jax.jit
def char_lstm_forward(input_ids, h0, c0, params):
    """Mirrors CharLSTM.forward: returns (logits (B*T, O), (h, c))."""
    # TODO(synk): num_layers > 1 would stack this recurrence; only the default
    # single-layer LSTM of the module is implemented here.
    emb_table, wih, whh, b_ih, b_hh, wfc, bfc = params

    # Fuse embedding + input projection + both biases into one (vocab, 4H)
    # table; the per-token input projection becomes a free gather (XLA-side,
    # fully parallel, off the serial recurrence critical path).
    fused_table = emb_table @ wih.T + (b_ih + b_hh)[None, :]    # (V, 4H)
    gates_x = jnp.take(fused_table, input_ids, axis=0)          # (B, T, 4H)

    whh_t = whh.T                                               # (H, 4H)
    wfc_t = wfc.T                                               # (H, O)
    bfc_2d = bfc[None, :]                                       # (1, O)

    out_flat, hT, cT = char_lstm_pallas(gates_x, h0, c0, whh_t, wfc_t, bfc_2d)
    return out_flat, (hT, cT)


def reference_forward(input_ids, h0, c0, params):
    """Pure-JAX reference matching PyTorch nn.LSTM semantics."""
    emb_table, wih, whh, b_ih, b_hh, wfc, bfc = params
    B, T = input_ids.shape
    H = h0.shape[-1]
    embedded = jnp.take(emb_table, input_ids, axis=0)           # (B, T, E)
    x_tbe = jnp.transpose(embedded, (1, 0, 2))                  # (T, B, E)

    def step(carry, x_t):
        h, c = carry
        gates = x_t @ wih.T + h @ whh.T + b_ih + b_hh
        i = jax.nn.sigmoid(gates[:, 0 * H:1 * H])
        f = jax.nn.sigmoid(gates[:, 1 * H:2 * H])
        g = jnp.tanh(gates[:, 2 * H:3 * H])
        o = jax.nn.sigmoid(gates[:, 3 * H:4 * H])
        c_new = f * c + i * g
        h_new = o * jnp.tanh(c_new)
        return (h_new, c_new), h_new

    (hT, cT), hs = lax.scan(step, (h0[0], c0[0]), x_tbe)        # hs: (T, B, H)
    out = jnp.transpose(hs, (1, 0, 2)).reshape(B * T, H) @ wfc.T + bfc
    return out, (hT[None], cT[None])


if __name__ == "__main__":
    # Small, module-consistent shapes.
    input_size = 32      # vocab
    embedding_size = 16
    hidden_size = 32
    output_size = 32
    num_layers = 1
    B, T = 2, 8

    key = jax.random.PRNGKey(0)
    ks = jax.random.split(key, 8)
    scale = 1.0 / jnp.sqrt(hidden_size)

    emb_table = jax.random.normal(ks[0], (input_size, embedding_size),
                                  jnp.float32)
    w_ih = jax.random.uniform(ks[1], (4 * hidden_size, embedding_size),
                              jnp.float32, -scale, scale)
    w_hh = jax.random.uniform(ks[2], (4 * hidden_size, hidden_size),
                              jnp.float32, -scale, scale)
    b_ih = jax.random.uniform(ks[3], (4 * hidden_size,), jnp.float32,
                              -scale, scale)
    b_hh = jax.random.uniform(ks[4], (4 * hidden_size,), jnp.float32,
                              -scale, scale)
    w_fc = jax.random.uniform(ks[5], (output_size, hidden_size), jnp.float32,
                              -scale, scale)
    b_fc = jax.random.uniform(ks[6], (output_size,), jnp.float32,
                              -scale, scale)
    params = (emb_table, w_ih, w_hh, b_ih, b_hh, w_fc, b_fc)

    input_ids = jax.random.randint(ks[7], (B, T), 0, input_size, jnp.int32)

    # init_hidden(batch_size): zeros of shape (num_layers, B, H).
    h0 = jnp.zeros((num_layers, B, hidden_size), jnp.float32)
    c0 = jnp.zeros((num_layers, B, hidden_size), jnp.float32)

    out, (hT, cT) = char_lstm_forward(input_ids, h0, c0, params)
    jax.block_until_ready((out, hT, cT))

    # Correctness check against pure-JAX reference (all f32 math kept).
    out_ref, (h_ref, c_ref) = reference_forward(input_ids, h0, c0, params)
    assert out.shape == (B * T, output_size)
    assert hT.shape == (num_layers, B, hidden_size)
    assert cT.shape == (num_layers, B, hidden_size)
    assert jnp.allclose(out, out_ref, atol=1e-5, rtol=1e-5)
    assert jnp.allclose(hT, h_ref, atol=1e-5, rtol=1e-5)
    assert jnp.allclose(cT, c_ref, atol=1e-5, rtol=1e-5)

    print("KERNEL_OK")
</pallas_src>

<mosaic_0001>
module attributes {stable_mosaic.version = 11 : i64} {
  func.func @char_lstm_kernel(%arg0: memref<2x8x128xf32, #tpu.memory_space<vmem>>, %arg1: memref<1x2x32xf32, #tpu.memory_space<vmem>>, %arg2: memref<1x2x32xf32, #tpu.memory_space<vmem>>, %arg3: memref<32x128xf32, #tpu.memory_space<vmem>>, %arg4: memref<32x32xf32, #tpu.memory_space<vmem>>, %arg5: memref<1x32xf32, #tpu.memory_space<vmem>>, %arg6: memref<16x32xf32, #tpu.memory_space<vmem>>, %arg7: memref<1x2x32xf32, #tpu.memory_space<vmem>>, %arg8: memref<1x2x32xf32, #tpu.memory_space<vmem>>, %arg9: memref<2x8x32xf32, #tpu.memory_space<vmem>>) attributes {dimension_semantics = [], scalar_prefetch = 0 : i64, scratch_operands = 1 : i64, tpu.core_type = #tpu.core_type<tc>} {
    %c0 = arith.constant 0 : index
    %c0_0 = arith.constant 0 : index
    %0 = vector.load %arg3[%c0, %c0_0] : memref<32x128xf32, #tpu.memory_space<vmem>>, vector<32x128xf32>
    %c0_1 = arith.constant 0 : index
    %c0_2 = arith.constant 0 : index
    %c0_3 = arith.constant 0 : index
    %1 = vector.load %arg1[%c0_1, %c0_2, %c0_3] : memref<1x2x32xf32, #tpu.memory_space<vmem>>, vector<1x2x32xf32>
    %2 = vector.shape_cast %1 : vector<1x2x32xf32> to vector<2x32xf32>
    %c0_4 = arith.constant 0 : index
    %c0_5 = arith.constant 0 : index
    %c0_6 = arith.constant 0 : index
    %3 = vector.load %arg2[%c0_4, %c0_5, %c0_6] : memref<1x2x32xf32, #tpu.memory_space<vmem>>, vector<1x2x32xf32>
    %4 = vector.shape_cast %3 : vector<1x2x32xf32> to vector<2x32xf32>
    %5 = tpu.iota {dimensions = array<i32: 1>} : vector<2x128xi32>
    %c64_i32 = arith.constant 64 : i32
    %6 = vector.broadcast %c64_i32 : i32 to vector<2x128xi32>
    %7 = arith.cmpi sge, %5, %6 : vector<2x128xi32>
    %c96_i32 = arith.constant 96 : i32
    %8 = vector.broadcast %c96_i32 : i32 to vector<2x128xi32>
    %9 = arith.cmpi slt, %5, %8 : vector<2x128xi32>
    %10 = arith.andi %7, %9 : vector<2x128xi1>
    %cst = arith.constant 1.000000e+00 : f32
    %cst_7 = arith.constant 5.000000e-01 : f32
    %11 = vector.broadcast %cst : f32 to vector<2x128xf32>
    %12 = vector.broadcast %cst_7 : f32 to vector<2x128xf32>
    %13 = arith.select %10, %11, %12 : vector<2x128xi1>, vector<2x128xf32>
    %cst_8 = arith.constant 0.000000e+00 : f32
    %cst_9 = arith.constant 5.000000e-01 : f32
    %14 = vector.broadcast %cst_8 : f32 to vector<2x128xf32>
    %15 = vector.broadcast %cst_9 : f32 to vector<2x128xf32>
    %16 = arith.select %10, %14, %15 : vector<2x128xi1>, vector<2x128xf32>
    %c0_10 = arith.constant 0 : index
    %c0_11 = arith.constant 0 : index
    %c0_12 = arith.constant 0 : index
    %17 = vector.load %arg0[%c0_10, %c0_11, %c0_12] : memref<2x8x128xf32, #tpu.memory_space<vmem>>, vector<2x1x128xf32>
    %18 = vector.shape_cast %17 : vector<2x1x128xf32> to vector<2x128xf32>
    %cst_13 = arith.constant dense<0.000000e+00> : vector<2x128xf32>
    %19 = tpu.matmul %2, %0, %cst_13 {dimension_numbers = #tpu.dot_dimension_numbers<[1], [0], [0], [1], [0, 0, 1, 1], [], []>} : vector<2x32xf32>, vector<32x128xf32>, vector<2x128xf32> -> vector<2x128xf32>
    %20 = arith.addf %18, %19 : vector<2x128xf32>
    %21 = arith.mulf %20, %13 : vector<2x128xf32>
    %22 = math.tanh %21 : vector<2x128xf32>
    %23 = arith.mulf %22, %13 : vector<2x128xf32>
    %24 = arith.addf %23, %16 : vector<2x128xf32>
    %25 = vector.extract_strided_slice %24 {offsets = [0, 0], sizes = [2, 32], strides = [1, 1]} : vector<2x128xf32> to vector<2x32xf32>
    %26 = vector.extract_strided_slice %24 {offsets = [0, 32], sizes = [2, 32], strides = [1, 1]} : vector<2x128xf32> to vector<2x32xf32>
    %27 = vector.extract_strided_slice %24 {offsets = [0, 64], sizes = [2, 32], strides = [1, 1]} : vector<2x128xf32> to vector<2x32xf32>
    %28 = vector.extract_strided_slice %24 {offsets = [0, 96], sizes = [2, 32], strides = [1, 1]} : vector<2x128xf32> to vector<2x32xf32>
    %29 = arith.mulf %26, %4 : vector<2x32xf32>
    %30 = arith.mulf %25, %27 : vector<2x32xf32>
    %31 = arith.addf %29, %30 : vector<2x32xf32>
    %32 = math.tanh %31 : vector<2x32xf32>
    %33 = arith.mulf %28, %32 : vector<2x32xf32>
    %c0_14 = arith.constant 0 : index
    %c0_15 = arith.constant 0 : index
    %c0_16 = arith.constant 0 : index
    %34 = vector.load %arg9[%c0_14, %c0_15, %c0_16] : memref<2x8x32xf32, #tpu.memory_space<vmem>>, vector<2x1x32xf32>
    %35 = vector.shape_cast %34 : vector<2x1x32xf32> to vector<2x32xf32>
    %36 = vector.shape_cast %33 : vector<2x32xf32> to vector<2x1x32xf32>
    tpu.vector_store %arg9[%c0_14, %c0_15, %c0_16], %36 {strides = array<i32>} : memref<2x8x32xf32, #tpu.memory_space<vmem>>, vector<2x1x32xf32>,
    %c0_17 = arith.constant 0 : index
    %c1 = arith.constant 1 : index
    %c0_18 = arith.constant 0 : index
    %37 = vector.load %arg0[%c0_17, %c1, %c0_18] : memref<2x8x128xf32, #tpu.memory_space<vmem>>, vector<2x1x128xf32>
    %38 = vector.shape_cast %37 : vector<2x1x128xf32> to vector<2x128xf32>
    %cst_19 = arith.constant dense<0.000000e+00> : vector<2x128xf32>
    %39 = tpu.matmul %33, %0, %cst_19 {dimension_numbers = #tpu.dot_dimension_numbers<[1], [0], [0], [1], [0, 0, 1, 1], [], []>} : vector<2x32xf32>, vector<32x128xf32>, vector<2x128xf32> -> vector<2x128xf32>
    %40 = arith.addf %38, %39 : vector<2x128xf32>
    %41 = arith.mulf %40, %13 : vector<2x128xf32>
    %42 = math.tanh %41 : vector<2x128xf32>
    %43 = arith.mulf %42, %13 : vector<2x128xf32>
    %44 = arith.addf %43, %16 : vector<2x128xf32>
    %45 = vector.extract_strided_slice %44 {offsets = [0, 0], sizes = [2, 32], strides = [1, 1]} : vector<2x128xf32> to vector<2x32xf32>
    %46 = vector.extract_strided_slice %44 {offsets = [0, 32], sizes = [2, 32], strides = [1, 1]} : vector<2x128xf32> to vector<2x32xf32>
    %47 = vector.extract_strided_slice %44 {offsets = [0, 64], sizes = [2, 32], strides = [1, 1]} : vector<2x128xf32> to vector<2x32xf32>
    %48 = vector.extract_strided_slice %44 {offsets = [0, 96], sizes = [2, 32], strides = [1, 1]} : vector<2x128xf32> to vector<2x32xf32>
    %49 = arith.mulf %46, %31 : vector<2x32xf32>
    %50 = arith.mulf %45, %47 : vector<2x32xf32>
    %51 = arith.addf %49, %50 : vector<2x32xf32>
    %52 = math.tanh %51 : vector<2x32xf32>
    %53 = arith.mulf %48, %52 : vector<2x32xf32>
    %c0_20 = arith.constant 0 : index
    %c1_21 = arith.constant 1 : index
    %c0_22 = arith.constant 0 : index
    %54 = vector.load %arg9[%c0_20, %c1_21, %c0_22] : memref<2x8x32xf32, #tpu.memory_space<vmem>>, vector<2x1x32xf32>
    %55 = vector.shape_cast %54 : vector<2x1x32xf32> to vector<2x32xf32>
    %56 = vector.shape_cast %53 : vector<2x32xf32> to vector<2x1x32xf32>
    tpu.vector_store %arg9[%c0_20, %c1_21, %c0_22], %56 {strides = array<i32>} : memref<2x8x32xf32, #tpu.memory_space<vmem>>, vector<2x1x32xf32>,
    %c0_23 = arith.constant 0 : index
    %c2 = arith.constant 2 : index
    %c0_24 = arith.constant 0 : index
    %57 = vector.load %arg0[%c0_23, %c2, %c0_24] : memref<2x8x128xf32, #tpu.memory_space<vmem>>, vector<2x1x128xf32>
    %58 = vector.shape_cast %57 : vector<2x1x128xf32> to vector<2x128xf32>
    %cst_25 = arith.constant dense<0.000000e+00> : vector<2x128xf32>
    %59 = tpu.matmul %53, %0, %cst_25 {dimension_numbers = #tpu.dot_dimension_numbers<[1], [0], [0], [1], [0, 0, 1, 1], [], []>} : vector<2x32xf32>, vector<32x128xf32>, vector<2x128xf32> -> vector<2x128xf32>
    %60 = arith.addf %58, %59 : vector<2x128xf32>
    %61 = arith.mulf %60, %13 : vector<2x128xf32>
    %62 = math.tanh %61 : vector<2x128xf32>
    %63 = arith.mulf %62, %13 : vector<2x128xf32>
    %64 = arith.addf %63, %16 : vector<2x128xf32>
    %65 = vector.extract_strided_slice %64 {offsets = [0, 0], sizes = [2, 32], strides = [1, 1]} : vector<2x128xf32> to vector<2x32xf32>
    %66 = vector.extract_strided_slice %64 {offsets = [0, 32], sizes = [2, 32], strides = [1, 1]} : vector<2x128xf32> to vector<2x32xf32>
    %67 = vector.extract_strided_slice %64 {offsets = [0, 64], sizes = [2, 32], strides = [1, 1]} : vector<2x128xf32> to vector<2x32xf32>
    %68 = vector.extract_strided_slice %64 {offsets = [0, 96], sizes = [2, 32], strides = [1, 1]} : vector<2x128xf32> to vector<2x32xf32>
    %69 = arith.mulf %66, %51 : vector<2x32xf32>
    %70 = arith.mulf %65, %67 : vector<2x32xf32>
    %71 = arith.addf %69, %70 : vector<2x32xf32>
    %72 = math.tanh %71 : vector<2x32xf32>
    %73 = arith.mulf %68, %72 : vector<2x32xf32>
    %c0_26 = arith.constant 0 : index
    %c2_27 = arith.constant 2 : index
    %c0_28 = arith.constant 0 : index
    %74 = vector.load %arg9[%c0_26, %c2_27, %c0_28] : memref<2x8x32xf32, #tpu.memory_space<vmem>>, vector<2x1x32xf32>
    %75 = vector.shape_cast %74 : vector<2x1x32xf32> to vector<2x32xf32>
    %76 = vector.shape_cast %73 : vector<2x32xf32> to vector<2x1x32xf32>
    tpu.vector_store %arg9[%c0_26, %c2_27, %c0_28], %76 {strides = array<i32>} : memref<2x8x32xf32, #tpu.memory_space<vmem>>, vector<2x1x32xf32>,
    %c0_29 = arith.constant 0 : index
    %c3 = arith.constant 3 : index
    %c0_30 = arith.constant 0 : index
    %77 = vector.load %arg0[%c0_29, %c3, %c0_30] : memref<2x8x128xf32, #tpu.memory_space<vmem>>, vector<2x1x128xf32>
    %78 = vector.shape_cast %77 : vector<2x1x128xf32> to vector<2x128xf32>
    %cst_31 = arith.constant dense<0.000000e+00> : vector<2x128xf32>
    %79 = tpu.matmul %73, %0, %cst_31 {dimension_numbers = #tpu.dot_dimension_numbers<[1], [0], [0], [1], [0, 0, 1, 1], [], []>} : vector<2x32xf32>, vector<32x128xf32>, vector<2x128xf32> -> vector<2x128xf32>
    %80 = arith.addf %78, %79 : vector<2x128xf32>
    %81 = arith.mulf %80, %13 : vector<2x128xf32>
    %82 = math.tanh %81 : vector<2x128xf32>
    %83 = arith.mulf %82, %13 : vector<2x128xf32>
    %84 = arith.addf %83, %16 : vector<2x128xf32>
    %85 = vector.extract_strided_slice %84 {offsets = [0, 0], sizes = [2, 32], strides = [1, 1]} : vector<2x128xf32> to vector<2x32xf32>
    %86 = vector.extract_strided_slice %84 {offsets = [0, 32], sizes = [2, 32], strides = [1, 1]} : vector<2x128xf32> to vector<2x32xf32>
    %87 = vector.extract_strided_slice %84 {offsets = [0, 64], sizes = [2, 32], strides = [1, 1]} : vector<2x128xf32> to vector<2x32xf32>
    %88 = vector.extract_strided_slice %84 {offsets = [0, 96], sizes = [2, 32], strides = [1, 1]} : vector<2x128xf32> to vector<2x32xf32>
    %89 = arith.mulf %86, %71 : vector<2x32xf32>
    %90 = arith.mulf %85, %87 : vector<2x32xf32>
    %91 = arith.addf %89, %90 : vector<2x32xf32>
    %92 = math.tanh %91 : vector<2x32xf32>
    %93 = arith.mulf %88, %92 : vector<2x32xf32>
    %c0_32 = arith.constant 0 : index
    %c3_33 = arith.constant 3 : index
    %c0_34 = arith.constant 0 : index
    %94 = vector.load %arg9[%c0_32, %c3_33, %c0_34] : memref<2x8x32xf32, #tpu.memory_space<vmem>>, vector<2x1x32xf32>
    %95 = vector.shape_cast %94 : vector<2x1x32xf32> to vector<2x32xf32>
    %96 = vector.shape_cast %93 : vector<2x32xf32> to vector<2x1x32xf32>
    tpu.vector_store %arg9[%c0_32, %c3_33, %c0_34], %96 {strides = array<i32>} : memref<2x8x32xf32, #tpu.memory_space<vmem>>, vector<2x1x32xf32>,
    %c0_35 = arith.constant 0 : index
    %c4 = arith.constant 4 : index
    %c0_36 = arith.constant 0 : index
    %97 = vector.load %arg0[%c0_35, %c4, %c0_36] : memref<2x8x128xf32, #tpu.memory_space<vmem>>, vector<2x1x128xf32>
    %98 = vector.shape_cast %97 : vector<2x1x128xf32> to vector<2x128xf32>
    %cst_37 = arith.constant dense<0.000000e+00> : vector<2x128xf32>
    %99 = tpu.matmul %93, %0, %cst_37 {dimension_numbers = #tpu.dot_dimension_numbers<[1], [0], [0], [1], [0, 0, 1, 1], [], []>} : vector<2x32xf32>, vector<32x128xf32>, vector<2x128xf32> -> vector<2x128xf32>
    %100 = arith.addf %98, %99 : vector<2x128xf32>
    %101 = arith.mulf %100, %13 : vector<2x128xf32>
    %102 = math.tanh %101 : vector<2x128xf32>
    %103 = arith.mulf %102, %13 : vector<2x128xf32>
    %104 = arith.addf %103, %16 : vector<2x128xf32>
    %105 = vector.extract_strided_slice %104 {offsets = [0, 0], sizes = [2, 32], strides = [1, 1]} : vector<2x128xf32> to vector<2x32xf32>
    %106 = vector.extract_strided_slice %104 {offsets = [0, 32], sizes = [2, 32], strides = [1, 1]} : vector<2x128xf32> to vector<2x32xf32>
    %107 = vector.extract_strided_slice %104 {offsets = [0, 64], sizes = [2, 32], strides = [1, 1]} : vector<2x128xf32> to vector<2x32xf32>
    %108 = vector.extract_strided_slice %104 {offsets = [0, 96], sizes = [2, 32], strides = [1, 1]} : vector<2x128xf32> to vector<2x32xf32>
    %109 = arith.mulf %106, %91 : vector<2x32xf32>
    %110 = arith.mulf %105, %107 : vector<2x32xf32>
    %111 = arith.addf %109, %110 : vector<2x32xf32>
    %112 = math.tanh %111 : vector<2x32xf32>
    %113 = arith.mulf %108, %112 : vector<2x32xf32>
    %c0_38 = arith.constant 0 : index
    %c4_39 = arith.constant 4 : index
    %c0_40 = arith.constant 0 : index
    %114 = vector.load %arg9[%c0_38, %c4_39, %c0_40] : memref<2x8x32xf32, #tpu.memory_space<vmem>>, vector<2x1x32xf32>
    %115 = vector.shape_cast %114 : vector<2x1x32xf32> to vector<2x32xf32>
    %116 = vector.shape_cast %113 : vector<2x32xf32> to vector<2x1x32xf32>
    tpu.vector_store %arg9[%c0_38, %c4_39, %c0_40], %116 {strides = array<i32>} : memref<2x8x32xf32, #tpu.memory_space<vmem>>, vector<2x1x32xf32>,
    %c0_41 = arith.constant 0 : index
    %c5 = arith.constant 5 : index
    %c0_42 = arith.constant 0 : index
    %117 = vector.load %arg0[%c0_41, %c5, %c0_42] : memref<2x8x128xf32, #tpu.memory_space<vmem>>, vector<2x1x128xf32>
    %118 = vector.shape_cast %117 : vector<2x1x128xf32> to vector<2x128xf32>
    %cst_43 = arith.constant dense<0.000000e+00> : vector<2x128xf32>
    %119 = tpu.matmul %113, %0, %cst_43 {dimension_numbers = #tpu.dot_dimension_numbers<[1], [0], [0], [1], [0, 0, 1, 1], [], []>} : vector<2x32xf32>, vector<32x128xf32>, vector<2x128xf32> -> vector<2x128xf32>
    %120 = arith.addf %118, %119 : vector<2x128xf32>
    %121 = arith.mulf %120, %13 : vector<2x128xf32>
    %122 = math.tanh %121 : vector<2x128xf32>
    %123 = arith.mulf %122, %13 : vector<2x128xf32>
    %124 = arith.addf %123, %16 : vector<2x128xf32>
    %125 = vector.extract_strided_slice %124 {offsets = [0, 0], sizes = [2, 32], strides = [1, 1]} : vector<2x128xf32> to vector<2x32xf32>
    %126 = vector.extract_strided_slice %124 {offsets = [0, 32], sizes = [2, 32], strides = [1, 1]} : vector<2x128xf32> to vector<2x32xf32>
    %127 = vector.extract_strided_slice %124 {offsets = [0, 64], sizes = [2, 32], strides = [1, 1]} : vector<2x128xf32> to vector<2x32xf32>
    %128 = vector.extract_strided_slice %124 {offsets = [0, 96], sizes = [2, 32], strides = [1, 1]} : vector<2x128xf32> to vector<2x32xf32>
    %129 = arith.mulf %126, %111 : vector<2x32xf32>
    %130 = arith.mulf %125, %127 : vector<2x32xf32>
    %131 = arith.addf %129, %130 : vector<2x32xf32>
    %132 = math.tanh %131 : vector<2x32xf32>
    %133 = arith.mulf %128, %132 : vector<2x32xf32>
    %c0_44 = arith.constant 0 : index
    %c5_45 = arith.constant 5 : index
    %c0_46 = arith.constant 0 : index
    %134 = vector.load %arg9[%c0_44, %c5_45, %c0_46] : memref<2x8x32xf32, #tpu.memory_space<vmem>>, vector<2x1x32xf32>
    %135 = vector.shape_cast %134 : vector<2x1x32xf32> to vector<2x32xf32>
    %136 = vector.shape_cast %133 : vector<2x32xf32> to vector<2x1x32xf32>
    tpu.vector_store %arg9[%c0_44, %c5_45, %c0_46], %136 {strides = array<i32>} : memref<2x8x32xf32, #tpu.memory_space<vmem>>, vector<2x1x32xf32>,
    %c0_47 = arith.constant 0 : index
    %c6 = arith.constant 6 : index
    %c0_48 = arith.constant 0 : index
    %137 = vector.load %arg0[%c0_47, %c6, %c0_48] : memref<2x8x128xf32, #tpu.memory_space<vmem>>, vector<2x1x128xf32>
    %138 = vector.shape_cast %137 : vector<2x1x128xf32> to vector<2x128xf32>
    %cst_49 = arith.constant dense<0.000000e+00> : vector<2x128xf32>
    %139 = tpu.matmul %133, %0, %cst_49 {dimension_numbers = #tpu.dot_dimension_numbers<[1], [0], [0], [1], [0, 0, 1, 1], [], []>} : vector<2x32xf32>, vector<32x128xf32>, vector<2x128xf32> -> vector<2x128xf32>
    %140 = arith.addf %138, %139 : vector<2x128xf32>
    %141 = arith.mulf %140, %13 : vector<2x128xf32>
    %142 = math.tanh %141 : vector<2x128xf32>
    %143 = arith.mulf %142, %13 : vector<2x128xf32>
    %144 = arith.addf %143, %16 : vector<2x128xf32>
    %145 = vector.extract_strided_slice %144 {offsets = [0, 0], sizes = [2, 32], strides = [1, 1]} : vector<2x128xf32> to vector<2x32xf32>
    %146 = vector.extract_strided_slice %144 {offsets = [0, 32], sizes = [2, 32], strides = [1, 1]} : vector<2x128xf32> to vector<2x32xf32>
    %147 = vector.extract_strided_slice %144 {offsets = [0, 64], sizes = [2, 32], strides = [1, 1]} : vector<2x128xf32> to vector<2x32xf32>
    %148 = vector.extract_strided_slice %144 {offsets = [0, 96], sizes = [2, 32], strides = [1, 1]} : vector<2x128xf32> to vector<2x32xf32>
    %149 = arith.mulf %146, %131 : vector<2x32xf32>
    %150 = arith.mulf %145, %147 : vector<2x32xf32>
    %151 = arith.addf %149, %150 : vector<2x32xf32>
    %152 = math.tanh %151 : vector<2x32xf32>
    %153 = arith.mulf %148, %152 : vector<2x32xf32>
    %c0_50 = arith.constant 0 : index
    %c6_51 = arith.constant 6 : index
    %c0_52 = arith.constant 0 : index
    %154 = vector.load %arg9[%c0_50, %c6_51, %c0_52] : memref<2x8x32xf32, #tpu.memory_space<vmem>>, vector<2x1x32xf32>
    %155 = vector.shape_cast %154 : vector<2x1x32xf32> to vector<2x32xf32>
    %156 = vector.shape_cast %153 : vector<2x32xf32> to vector<2x1x32xf32>
    tpu.vector_store %arg9[%c0_50, %c6_51, %c0_52], %156 {strides = array<i32>} : memref<2x8x32xf32, #tpu.memory_space<vmem>>, vector<2x1x32xf32>,
    %c0_53 = arith.constant 0 : index
    %c7 = arith.constant 7 : index
    %c0_54 = arith.constant 0 : index
    %157 = vector.load %arg0[%c0_53, %c7, %c0_54] : memref<2x8x128xf32, #tpu.memory_space<vmem>>, vector<2x1x128xf32>
    %158 = vector.shape_cast %157 : vector<2x1x128xf32> to vector<2x128xf32>
    %cst_55 = arith.constant dense<0.000000e+00> : vector<2x128xf32>
    %159 = tpu.matmul %153, %0, %cst_55 {dimension_numbers = #tpu.dot_dimension_numbers<[1], [0], [0], [1], [0, 0, 1, 1], [], []>} : vector<2x32xf32>, vector<32x128xf32>, vector<2x128xf32> -> vector<2x128xf32>
    %160 = arith.addf %158, %159 : vector<2x128xf32>
    %161 = arith.mulf %160, %13 : vector<2x128xf32>
    %162 = math.tanh %161 : vector<2x128xf32>
    %163 = arith.mulf %162, %13 : vector<2x128xf32>
    %164 = arith.addf %163, %16 : vector<2x128xf32>
    %165 = vector.extract_strided_slice %164 {offsets = [0, 0], sizes = [2, 32], strides = [1, 1]} : vector<2x128xf32> to vector<2x32xf32>
    %166 = vector.extract_strided_slice %164 {offsets = [0, 32], sizes = [2, 32], strides = [1, 1]} : vector<2x128xf32> to vector<2x32xf32>
    %167 = vector.extract_strided_slice %164 {offsets = [0, 64], sizes = [2, 32], strides = [1, 1]} : vector<2x128xf32> to vector<2x32xf32>
    %168 = vector.extract_strided_slice %164 {offsets = [0, 96], sizes = [2, 32], strides = [1, 1]} : vector<2x128xf32> to vector<2x32xf32>
    %169 = arith.mulf %166, %151 : vector<2x32xf32>
    %170 = arith.mulf %165, %167 : vector<2x32xf32>
    %171 = arith.addf %169, %170 : vector<2x32xf32>
    %172 = math.tanh %171 : vector<2x32xf32>
    %173 = arith.mulf %168, %172 : vector<2x32xf32>
    %c0_56 = arith.constant 0 : index
    %c7_57 = arith.constant 7 : index
    %c0_58 = arith.constant 0 : index
    %174 = vector.load %arg9[%c0_56, %c7_57, %c0_58] : memref<2x8x32xf32, #tpu.memory_space<vmem>>, vector<2x1x32xf32>
    %175 = vector.shape_cast %174 : vector<2x1x32xf32> to vector<2x32xf32>
    %176 = vector.shape_cast %173 : vector<2x32xf32> to vector<2x1x32xf32>
    tpu.vector_store %arg9[%c0_56, %c7_57, %c0_58], %176 {strides = array<i32>} : memref<2x8x32xf32, #tpu.memory_space<vmem>>, vector<2x1x32xf32>,
    %c0_59 = arith.constant 0 : index
    %c0_60 = arith.constant 0 : index
    %c0_61 = arith.constant 0 : index
    %177 = vector.load %arg9[%c0_59, %c0_60, %c0_61] : memref<2x8x32xf32, #tpu.memory_space<vmem>>, vector<2x8x32xf32>
    %178 = vector.shape_cast %177 : vector<2x8x32xf32> to vector<16x32xf32>
    %c0_62 = arith.constant 0 : index
    %c0_63 = arith.constant 0 : index
    %179 = vector.load %arg4[%c0_62, %c0_63] : memref<32x32xf32, #tpu.memory_space<vmem>>, vector<32x32xf32>
    %cst_64 = arith.constant dense<0.000000e+00> : vector<16x32xf32>
    %180 = tpu.matmul %178, %179, %cst_64 {dimension_numbers = #tpu.dot_dimension_numbers<[1], [0], [0], [1], [0, 0, 1, 1], [], []>} : vector<16x32xf32>, vector<32x32xf32>, vector<16x32xf32> -> vector<16x32xf32>
    %c0_65 = arith.constant 0 : index
    %c0_66 = arith.constant 0 : index
    %181 = vector.load %arg5[%c0_65, %c0_66] : memref<1x32xf32, #tpu.memory_space<vmem>>, vector<1x32xf32>
    %182 = vector.broadcast %181 : vector<1x32xf32> to vector<16x32xf32>
    %183 = arith.addf %180, %182 : vector<16x32xf32>
    %c0_67 = arith.constant 0 : index
    %c0_68 = arith.constant 0 : index
    %184 = vector.load %arg6[%c0_67, %c0_68] : memref<16x32xf32, #tpu.memory_space<vmem>>, vector<16x32xf32>
    tpu.vector_store %arg6[%c0_67, %c0_68], %183 {strides = array<i32>} : memref<16x32xf32, #tpu.memory_space<vmem>>, vector<16x32xf32>,
    %c0_69 = arith.constant 0 : index
    %c0_70 = arith.constant 0 : index
    %c0_71 = arith.constant 0 : index
    %185 = vector.load %arg7[%c0_69, %c0_70, %c0_71] : memref<1x2x32xf32, #tpu.memory_space<vmem>>, vector<1x2x32xf32>
    %186 = vector.shape_cast %185 : vector<1x2x32xf32> to vector<2x32xf32>
    %187 = vector.shape_cast %173 : vector<2x32xf32> to vector<1x2x32xf32>
    tpu.vector_store %arg7[%c0_69, %c0_70, %c0_71], %187 {strides = array<i32>} : memref<1x2x32xf32, #tpu.memory_space<vmem>>, vector<1x2x32xf32>,
    %c0_72 = arith.constant 0 : index
    %c0_73 = arith.constant 0 : index
    %c0_74 = arith.constant 0 : index
    %188 = vector.load %arg8[%c0_72, %c0_73, %c0_74] : memref<1x2x32xf32, #tpu.memory_space<vmem>>, vector<1x2x32xf32>
    %189 = vector.shape_cast %188 : vector<1x2x32xf32> to vector<2x32xf32>
    %190 = vector.shape_cast %171 : vector<2x32xf32> to vector<1x2x32xf32>
    tpu.vector_store %arg8[%c0_72, %c0_73, %c0_74], %190 {strides = array<i32>} : memref<1x2x32xf32, #tpu.memory_space<vmem>>, vector<1x2x32xf32>,
    return
  }
}

</mosaic_0001>

<llo_original>
// kernel: char_lstm_forward.1
$region0: #{char_lstm_forward.1}
  #allocation0 [shape = 'u32[]', space=smem, size = 0x4, offset = 0x4, fixed_abs, tag = 'smem constant byte address 0x4 - core index']
  #allocation1 [shape = 'u32[72,128]{1,0:T(1,128)}', space=vmem, size = 0x9000, scoped, tag = 'internal scratch']
  #allocation2 [shape = 'f32[2,8,32]{2,1,0:T(8,128)}', space=vmem, size = 0x2000, scoped, tag = 'scratch operand']
  %s0 = inlined_call_operand.vmem [shape: f32[2,8,128], index: 0, kind: input, shape index: {}]
  %s1 = inlined_call_operand.vmem [shape: f32[1,2,32], index: 1, kind: input, shape index: {}]
  %s2 = inlined_call_operand.vmem [shape: f32[1,2,32], index: 2, kind: input, shape index: {}]
  %s3 = inlined_call_operand.vmem [shape: f32[32,128], index: 3, kind: input, shape index: {}]
  %s4 = inlined_call_operand.vmem [shape: f32[32,32], index: 4, kind: input, shape index: {}]
  %s5 = inlined_call_operand.vmem [shape: f32[1,32], index: 5, kind: input, shape index: {}]
  %s6 = inlined_call_operand.hbm [shape: f32[16,32], index: 6, kind: output, shape index: {0}]
  %s7 = inlined_call_operand.hbm [shape: f32[1,2,32], index: 7, kind: output, shape index: {1}]
  %s8 = inlined_call_operand.hbm [shape: f32[1,2,32], index: 8, kind: output, shape index: {2}]
  %9 = xla_tuple %s6, %s7, %s8
  %s10 = sld [smem:[#allocation0]]
  $region50: #{char_lstm_forward.1} parent=0
    _
  %s12 = ssub.s32 1, %s10
  %s13 = scalar_select 0, %s12, %s10
  $region1: #{char_lstm_forward.1} parent=0
    #allocation3 [shape = 'u8[8192]{0}', space=vmem, size = 0x2000, scoped, tag = 'output window, operand 0, single buffered']
    #allocation4 [shape = 's32[1]{0}', space=sflag, size = 0x4, scoped, tag = 'scoped memory for char_lstm_forward.1']
    #allocation5 [shape = 'u8[1024]{0}', space=vmem, size = 0x400, scoped, tag = 'output window, operand 1, single buffered']
    #allocation6 [shape = 's32[1]{0}', space=sflag, size = 0x4, scoped, tag = 'scoped memory for char_lstm_forward.1']
    #allocation7 [shape = 'u8[1024]{0}', space=vmem, size = 0x400, scoped, tag = 'output window, operand 2, single buffered']
    %14 = vsyncpa [#allocation4], 0
    %15 = vsyncpa [#allocation6], 0
    // Predicated region
    $region2: #{char_lstm_forward.1} parent=1 // pred_check
      _
    $region3: #{char_lstm_forward.1} parent=1 // pred_check_branch
      %17 = sbr.rel (0) target = $region5
    $region4: #{char_lstm_forward.1} parent=1 // pred_region
      _
    $region5: #{char_lstm_forward.1} parent=1 // pred_fallthru
      _
    // Predicated region
    $region6: #{char_lstm_forward.1} parent=1 // pred_check
      _
    $region7: #{char_lstm_forward.1} parent=1 // pred_check_branch
      %19 = sbr.rel (0) target = $region9
    $region8: #{char_lstm_forward.1} parent=1 // pred_region
      _
    $region9: #{char_lstm_forward.1} parent=1 // pred_fallthru
      _
    // Predicated region
    $region10: #{char_lstm_forward.1} parent=1 // pred_check
      _
    $region11: #{char_lstm_forward.1} parent=1 // pred_check_branch
      %21 = sbr.rel (0) target = $region13
    $region12: #{char_lstm_forward.1} parent=1 // pred_region
      _
    $region13: #{char_lstm_forward.1} parent=1 // pred_fallthru
      _
    // Predicated region
    $region14: #{char_lstm_forward.1} parent=1 // pred_check
      _
    $region15: #{char_lstm_forward.1} parent=1 // pred_check_branch
      %23 = sbr.rel (0) target = $region17
    $region16: #{char_lstm_forward.1} parent=1 // pred_region
      _
    $region17: #{char_lstm_forward.1} parent=1 // pred_fallthru
      _
    // Predicated region
    $region18: #{char_lstm_forward.1} parent=1 // pred_check
      _
    $region19: #{char_lstm_forward.1} parent=1 // pred_check_branch
      %25 = sbr.rel (0) target = $region21
    $region20: #{char_lstm_forward.1} parent=1 // pred_region
      _
    $region21: #{char_lstm_forward.1} parent=1 // pred_fallthru
      _
    // Predicated region
    $region22: #{char_lstm_forward.1} parent=1 // pred_check
      _
    $region23: #{char_lstm_forward.1} parent=1 // pred_check_branch
      %27 = sbr.rel (0) target = $region25
    $region24: #{char_lstm_forward.1} parent=1 // pred_region
      _
    $region25: #{char_lstm_forward.1} parent=1 // pred_fallthru
      _
    %v28 = vld [vmem:[%s3] sm:$0xff]
    %v29 = vld [vmem:[%s3 + $0x8] sm:$0xff]
    %v30 = vld [vmem:[%s3 + $0x10] sm:$0xff]
    %v31 = vld [vmem:[%s3 + $0x18] sm:$0xff]
    %v32 = vld [vmem:[%s1] sm:$0x3]
    %v33 = vld [vmem:[%s2] sm:$0x3]
    %v34 = vlaneseq
    %v35 = vand.u32 %v34, 127
    %vm36 = vcmp.ge.s32.totalorder %v35, 64
    %vm37 = vcmp.lt.s32.totalorder %v35, 96
    %vm38 = vmand %vm36, %vm37
    %v39 = vsel %vm38, 1.0, 0.5
    %v40 = vsel %vm38, 0.0, 0.5
    %v41 = vld [vmem:[%s0] sm:$0x1]
    %v42 = vld [vmem:[%s0 + $0x8] sm:$0x1]
    %vm43 = vcmask 261120
    %v45 = vsel %vm43, %v32, 0
    %47 = vmatpush.msra.mxu0 0.0
    %48 = vmatpush.msra.mxu0 0.0
    %49 = vmatpush.msra.mxu0 0.0
    %50 = vmatpush.msra.mxu0 0.0
    %51 = vmatpush.msra.mxu0 0.0
    %52 = vmatpush.msra.mxu0 0.0
    %53 = vmatpush.msra.mxu0 0.0
    %54 = vmatpush.msra.mxu0 0.0
    %55 = vmatpush.msra.mxu0 0.0
    %56 = vmatpush.msra.mxu0 0.0
    %57 = vmatpush.msra.mxu0 0.0
    %58 = vmatpush.msra.mxu0 0.0
    %59 = vmatpush.msra.mxu0 %v31
    %60 = vmatpush.msra.mxu0 %v30
    %61 = vmatpush.msra.mxu0 %v29
    %62 = vmatpush.msra.mxu0 %v28
    %63 = vmatmul.f32.gmra.mxu0 %v45
    %v64 = vpop.f32.mrf.mxu0
    %v65 = vadd.f32 0.0, %v64
    %66 = vdwg.mxu0
    %v68 = vrot.slane %v65, 1
    %v71 = vadd.f32 %v41, %v65
    %v72 = vadd.f32 %v42, %v68
    %v73 = vmul.f32 %v71, %v39
    %v74 = vmul.f32 %v72, %v39
    %v75 = vtanh.pop %v73
    %v76 = vtanh.pop %v74
    %v77 = vmul.f32 %v75, %v39
    %v78 = vmul.f32 %v76, %v39
    %v79 = vadd.f32 %v77, %v40
    %v80 = vadd.f32 %v78, %v40
    %v82 = vrot.slane %v33, 1
    %83 = vrot.lane.b32.xlu0 %v33, 32
    %v84 = vpop.permute.xlu0 %83
    %85 = vrot.lane.b32.xlu0 %v82, 32
    %v86 = vpop.permute.xlu0 %85
    %v89 = vmul.f32 %v79, %v84
    %v90 = vmul.f32 %v80, %v86
    %93 = vrot.lane.b32.xlu0 %v79, 64
    %v94 = vpop.permute.xlu0 %93
    %95 = vrot.lane.b32.xlu0 %v80, 64
    %v96 = vpop.permute.xlu0 %95
    %v99 = vmul.f32 %v79, %v94
    %v100 = vmul.f32 %v80, %v96
    %103 = vrot.lane.b32.xlu0 %v99, 32
    %v104 = vpop.permute.xlu0 %103
    %105 = vrot.lane.b32.xlu0 %v100, 32
    %v106 = vpop.permute.xlu0 %105
    %v109 = vadd.f32 %v89, %v104
    %v110 = vadd.f32 %v90, %v106
    %v111 = vtanh.pop %v109
    %v112 = vtanh.pop %v110
    %115 = vrot.lane.b32.xlu0 %v111, 64
    %v116 = vpop.permute.xlu0 %115
    %117 = vrot.lane.b32.xlu0 %v112, 64
    %v118 = vpop.permute.xlu0 %117
    %v121 = vmul.f32 %v79, %v116
    %v122 = vmul.f32 %v80, %v118
    %125 = vrot.lane.b32.xlu0 %v121, 32
    %v126 = vpop.permute.xlu0 %125
    %127 = vrot.lane.b32.xlu0 %v122, 32
    %v128 = vpop.permute.xlu0 %127
    %vm131 = vcmask 253952
    %132 = vst.msk [vmem:[#allocation2] sm:$0x1] %vm131, %v126
    %133 = vst.msk [vmem:[#allocation2 + $0x8] sm:$0x1] %vm131, %v128
    %v134 = vld [vmem:[%s0 + $0x1] sm:$0x1]
    %v135 = vld [vmem:[%s0 + $0x9] sm:$0x1]
    %v136 = vrot.slane %v122, 7
    %vm137 = vcmask 1041409
    %v138 = vsel %vm137, %v136, %v121
    %139 = vrot.lane.b32.xlu0 %v138, 32
    %v140 = vpop.permute.xlu0 %139
    %v141 = vsel %vm43, %v140, 0
    %143 = vmatpush.msra.mxu0 0.0
    %144 = vmatpush.msra.mxu0 0.0
    %145 = vmatpush.msra.mxu0 0.0
    %146 = vmatpush.msra.mxu0 0.0
    %147 = vmatpush.msra.mxu0 0.0
    %148 = vmatpush.msra.mxu0 0.0
    %149 = vmatpush.msra.mxu0 0.0
    %150 = vmatpush.msra.mxu0 0.0
    %151 = vmatpush.msra.mxu0 0.0
    %152 = vmatpush.msra.mxu0 0.0
    %153 = vmatpush.msra.mxu0 0.0
    %154 = vmatpush.msra.mxu0 0.0
    %155 = vmatpush.msra.mxu0 %v31
    %156 = vmatpush.msra.mxu0 %v30
    %157 = vmatpush.msra.mxu0 %v29
    %158 = vmatpush.msra.mxu0 %v28
    %159 = vmatmul.f32.gmra.mxu0 %v141
    %v160 = vpop.f32.mrf.mxu0
    %v161 = vadd.f32 0.0, %v160
    %162 = vdwg.mxu0
    %v164 = vrot.slane %v161, 1
    %v167 = vadd.f32 %v134, %v161
    %v168 = vadd.f32 %v135, %v164
    %v169 = vmul.f32 %v167, %v39
    %v170 = vmul.f32 %v168, %v39
    %v171 = vtanh.pop %v169
    %v172 = vtanh.pop %v170
    %v173 = vmul.f32 %v171, %v39
    %v174 = vmul.f32 %v172, %v39
    %v175 = vadd.f32 %v173, %v40
    %v176 = vadd.f32 %v174, %v40
    %v177 = vmul.f32 %v175, %v109
    %v178 = vmul.f32 %v176, %v110
    %181 = vrot.lane.b32.xlu0 %v175, 64
    %v182 = vpop.permute.xlu0 %181
    %183 = vrot.lane.b32.xlu0 %v176, 64
    %v184 = vpop.permute.xlu0 %183
    %v187 = vmul.f32 %v175, %v182
    %v188 = vmul.f32 %v176, %v184
    %191 = vrot.lane.b32.xlu0 %v187, 32
    %v192 = vpop.permute.xlu0 %191
    %193 = vrot.lane.b32.xlu0 %v188, 32
    %v194 = vpop.permute.xlu0 %193
    %v197 = vadd.f32 %v177, %v192
    %v198 = vadd.f32 %v178, %v194
    %v199 = vtanh.pop %v197
    %v200 = vtanh.pop %v198
    %203 = vrot.lane.b32.xlu0 %v199, 64
    %v204 = vpop.permute.xlu0 %203
    %205 = vrot.lane.b32.xlu0 %v200, 64
    %v206 = vpop.permute.xlu0 %205
    %v209 = vmul.f32 %v175, %v204
    %v210 = vmul.f32 %v176, %v206
    %213 = vrot.lane.b32.xlu0 %v209, 32
    %v214 = vpop.permute.xlu0 %213
    %215 = vrot.lane.b32.xlu0 %v210, 32
    %v216 = vpop.permute.xlu0 %215
    %219 = vst.msk [vmem:[#allocation2 + $0x1] sm:$0x1] %vm131, %v214
    %220 = vst.msk [vmem:[#allocation2 + $0x9] sm:$0x1] %vm131, %v216
    %v221 = vld [vmem:[%s0 + $0x2] sm:$0x1]
    %v222 = vld [vmem:[%s0 + $0xa] sm:$0x1]
    %v223 = vrot.slane %v210, 7
    %v224 = vsel %vm137, %v223, %v209
    %225 = vrot.lane.b32.xlu0 %v224, 32
    %v226 = vpop.permute.xlu0 %225
    %v227 = vsel %vm43, %v226, 0
    %229 = vmatpush.msra.mxu0 0.0
    %230 = vmatpush.msra.mxu0 0.0
    %231 = vmatpush.msra.mxu0 0.0
    %232 = vmatpush.msra.mxu0 0.0
    %233 = vmatpush.msra.mxu0 0.0
    %234 = vmatpush.msra.mxu0 0.0
    %235 = vmatpush.msra.mxu0 0.0
    %236 = vmatpush.msra.mxu0 0.0
    %237 = vmatpush.msra.mxu0 0.0
    %238 = vmatpush.msra.mxu0 0.0
    %239 = vmatpush.msra.mxu0 0.0
    %240 = vmatpush.msra.mxu0 0.0
    %241 = vmatpush.msra.mxu0 %v31
    %242 = vmatpush.msra.mxu0 %v30
    %243 = vmatpush.msra.mxu0 %v29
    %244 = vmatpush.msra.mxu0 %v28
    %245 = vmatmul.f32.gmra.mxu0 %v227
    %v246 = vpop.f32.mrf.mxu0
    %v247 = vadd.f32 0.0, %v246
    %248 = vdwg.mxu0
    %v250 = vrot.slane %v247, 1
    %v253 = vadd.f32 %v221, %v247
    %v254 = vadd.f32 %v222, %v250
    %v255 = vmul.f32 %v253, %v39
    %v256 = vmul.f32 %v254, %v39
    %v257 = vtanh.pop %v255
    %v258 = vtanh.pop %v256
    %v259 = vmul.f32 %v257, %v39
    %v260 = vmul.f32 %v258, %v39
    %v261 = vadd.f32 %v259, %v40
    %v262 = vadd.f32 %v260, %v40
    %v263 = vmul.f32 %v261, %v197
    %v264 = vmul.f32 %v262, %v198
    %267 = vrot.lane.b32.xlu0 %v261, 64
    %v268 = vpop.permute.xlu0 %267
    %269 = vrot.lane.b32.xlu0 %v262, 64
    %v270 = vpop.permute.xlu0 %269
    %v273 = vmul.f32 %v261, %v268
    %v274 = vmul.f32 %v262, %v270
    %277 = vrot.lane.b32.xlu0 %v273, 32
    %v278 = vpop.permute.xlu0 %277
    %279 = vrot.lane.b32.xlu0 %v274, 32
    %v280 = vpop.permute.xlu0 %279
    %v283 = vadd.f32 %v263, %v278
    %v284 = vadd.f32 %v264, %v280
    %v285 = vtanh.pop %v283
    %v286 = vtanh.pop %v284
    %289 = vrot.lane.b32.xlu0 %v285, 64
    %v290 = vpop.permute.xlu0 %289
    %291 = vrot.lane.b32.xlu0 %v286, 64
    %v292 = vpop.permute.xlu0 %291
    %v295 = vmul.f32 %v261, %v290
    %v296 = vmul.f32 %v262, %v292
    %299 = vrot.lane.b32.xlu0 %v295, 32
    %v300 = vpop.permute.xlu0 %299
    %301 = vrot.lane.b32.xlu0 %v296, 32
    %v302 = vpop.permute.xlu0 %301
    %305 = vst.msk [vmem:[#allocation2 + $0x2] sm:$0x1] %vm131, %v300
    %306 = vst.msk [vmem:[#allocation2 + $0xa] sm:$0x1] %vm131, %v302
    %v307 = vld [vmem:[%s0 + $0x3] sm:$0x1]
    %v308 = vld [vmem:[%s0 + $0xb] sm:$0x1]
    %v309 = vrot.slane %v296, 7
    %v310 = vsel %vm137, %v309, %v295
    %311 = vrot.lane.b32.xlu0 %v310, 32
    %v312 = vpop.permute.xlu0 %311
    %v313 = vsel %vm43, %v312, 0
    %315 = vmatpush.msra.mxu0 0.0
    %316 = vmatpush.msra.mxu0 0.0
    %317 = vmatpush.msra.mxu0 0.0
    %318 = vmatpush.msra.mxu0 0.0
    %319 = vmatpush.msra.mxu0 0.0
    %320 = vmatpush.msra.mxu0 0.0
    %321 = vmatpush.msra.mxu0 0.0
    %322 = vmatpush.msra.mxu0 0.0
    %323 = vmatpush.msra.mxu0 0.0
    %324 = vmatpush.msra.mxu0 0.0
    %325 = vmatpush.msra.mxu0 0.0
    %326 = vmatpush.msra.mxu0 0.0
    %327 = vmatpush.msra.mxu0 %v31
    %328 = vmatpush.msra.mxu0 %v30
    %329 = vmatpush.msra.mxu0 %v29
    %330 = vmatpush.msra.mxu0 %v28
    %331 = vmatmul.f32.gmra.mxu0 %v313
    %v332 = vpop.f32.mrf.mxu0
    %v333 = vadd.f32 0.0, %v332
    %334 = vdwg.mxu0
    %v336 = vrot.slane %v333, 1
    %v339 = vadd.f32 %v307, %v333
    %v340 = vadd.f32 %v308, %v336
    %v341 = vmul.f32 %v339, %v39
    %v342 = vmul.f32 %v340, %v39
    %v343 = vtanh.pop %v341
    %v344 = vtanh.pop %v342
    %v345 = vmul.f32 %v343, %v39
    %v346 = vmul.f32 %v344, %v39
    %v347 = vadd.f32 %v345, %v40
    %v348 = vadd.f32 %v346, %v40
    %v349 = vmul.f32 %v347, %v283
    %v350 = vmul.f32 %v348, %v284
    %353 = vrot.lane.b32.xlu0 %v347, 64
    %v354 = vpop.permute.xlu0 %353
    %355 = vrot.lane.b32.xlu0 %v348, 64
    %v356 = vpop.permute.xlu0 %355
    %v359 = vmul.f32 %v347, %v354
    %v360 = vmul.f32 %v348, %v356
    %363 = vrot.lane.b32.xlu0 %v359, 32
    %v364 = vpop.permute.xlu0 %363
    %365 = vrot.lane.b32.xlu0 %v360, 32
    %v366 = vpop.permute.xlu0 %365
    %v369 = vadd.f32 %v349, %v364
    %v370 = vadd.f32 %v350, %v366
    %v371 = vtanh.pop %v369
    %v372 = vtanh.pop %v370
    %375 = vrot.lane.b32.xlu0 %v371, 64
    %v376 = vpop.permute.xlu0 %375
    %377 = vrot.lane.b32.xlu0 %v372, 64
    %v378 = vpop.permute.xlu0 %377
    %v381 = vmul.f32 %v347, %v376
    %v382 = vmul.f32 %v348, %v378
    %385 = vrot.lane.b32.xlu0 %v381, 32
    %v386 = vpop.permute.xlu0 %385
    %387 = vrot.lane.b32.xlu0 %v382, 32
    %v388 = vpop.permute.xlu0 %387
    %391 = vst.msk [vmem:[#allocation2 + $0x3] sm:$0x1] %vm131, %v386
    %392 = vst.msk [vmem:[#allocation2 + $0xb] sm:$0x1] %vm131, %v388
    %v393 = vld [vmem:[%s0 + $0x4] sm:$0x1]
    %v394 = vld [vmem:[%s0 + $0xc] sm:$0x1]
    %v395 = vrot.slane %v382, 7
    %v396 = vsel %vm137, %v395, %v381
    %397 = vrot.lane.b32.xlu0 %v396, 32
    %v398 = vpop.permute.xlu0 %397
    %v399 = vsel %vm43, %v398, 0
    %401 = vmatpush.msra.mxu0 0.0
    %402 = vmatpush.msra.mxu0 0.0
    %403 = vmatpush.msra.mxu0 0.0
    %404 = vmatpush.msra.mxu0 0.0
    %405 = vmatpush.msra.mxu0 0.0
    %406 = vmatpush.msra.mxu0 0.0
    %407 = vmatpush.msra.mxu0 0.0
    %408 = vmatpush.msra.mxu0 0.0
    %409 = vmatpush.msra.mxu0 0.0
    %410 = vmatpush.msra.mxu0 0.0
    %411 = vmatpush.msra.mxu0 0.0
    %412 = vmatpush.msra.mxu0 0.0
    %413 = vmatpush.msra.mxu0 %v31
    %414 = vmatpush.msra.mxu0 %v30
    %415 = vmatpush.msra.mxu0 %v29
    %416 = vmatpush.msra.mxu0 %v28
    %417 = vmatmul.f32.gmra.mxu0 %v399
    %v418 = vpop.f32.mrf.mxu0
    %v419 = vadd.f32 0.0, %v418
    %420 = vdwg.mxu0
    %v422 = vrot.slane %v419, 1
    %v425 = vadd.f32 %v393, %v419
    %v426 = vadd.f32 %v394, %v422
    %v427 = vmul.f32 %v425, %v39
    %v428 = vmul.f32 %v426, %v39
    %v429 = vtanh.pop %v427
    %v430 = vtanh.pop %v428
    %v431 = vmul.f32 %v429, %v39
    %v432 = vmul.f32 %v430, %v39
    %v433 = vadd.f32 %v431, %v40
    %v434 = vadd.f32 %v432, %v40
    %v435 = vmul.f32 %v433, %v369
    %v436 = vmul.f32 %v434, %v370
    %439 = vrot.lane.b32.xlu0 %v433, 64
    %v440 = vpop.permute.xlu0 %439
    %441 = vrot.lane.b32.xlu0 %v434, 64
    %v442 = vpop.permute.xlu0 %441
    %v445 = vmul.f32 %v433, %v440
    %v446 = vmul.f32 %v434, %v442
    %449 = vrot.lane.b32.xlu0 %v445, 32
    %v450 = vpop.permute.xlu0 %449
    %451 = vrot.lane.b32.xlu0 %v446, 32
    %v452 = vpop.permute.xlu0 %451
    %v455 = vadd.f32 %v435, %v450
    %v456 = vadd.f32 %v436, %v452
    %v457 = vtanh.pop %v455
    %v458 = vtanh.pop %v456
    %461 = vrot.lane.b32.xlu0 %v457, 64
    %v462 = vpop.permute.xlu0 %461
    %463 = vrot.lane.b32.xlu0 %v458, 64
    %v464 = vpop.permute.xlu0 %463
    %v467 = vmul.f32 %v433, %v462
    %v468 = vmul.f32 %v434, %v464
    %471 = vrot.lane.b32.xlu0 %v467, 32
    %v472 = vpop.permute.xlu0 %471
    %473 = vrot.lane.b32.xlu0 %v468, 32
    %v474 = vpop.permute.xlu0 %473
    %477 = vst.msk [vmem:[#allocation2 + $0x4] sm:$0x1] %vm131, %v472
    %478 = vst.msk [vmem:[#allocation2 + $0xc] sm:$0x1] %vm131, %v474
    %v479 = vld [vmem:[%s0 + $0x5] sm:$0x1]
    %v480 = vld [vmem:[%s0 + $0xd] sm:$0x1]
    %v481 = vrot.slane %v468, 7
    %v482 = vsel %vm137, %v481, %v467
    %483 = vrot.lane.b32.xlu0 %v482, 32
    %v484 = vpop.permute.xlu0 %483
    %v485 = vsel %vm43, %v484, 0
    %487 = vmatpush.msra.mxu0 0.0
    %488 = vmatpush.msra.mxu0 0.0
    %489 = vmatpush.msra.mxu0 0.0
    %490 = vmatpush.msra.mxu0 0.0
    %491 = vmatpush.msra.mxu0 0.0
    %492 = vmatpush.msra.mxu0 0.0
    %493 = vmatpush.msra.mxu0 0.0
    %494 = vmatpush.msra.mxu0 0.0
    %495 = vmatpush.msra.mxu0 0.0
    %496 = vmatpush.msra.mxu0 0.0
    %497 = vmatpush.msra.mxu0 0.0
    %498 = vmatpush.msra.mxu0 0.0
    %499 = vmatpush.msra.mxu0 %v31
    %500 = vmatpush.msra.mxu0 %v30
    %501 = vmatpush.msra.mxu0 %v29
    %502 = vmatpush.msra.mxu0 %v28
    %503 = vmatmul.f32.gmra.mxu0 %v485
    %v504 = vpop.f32.mrf.mxu0
    %v505 = vadd.f32 0.0, %v504
    %506 = vdwg.mxu0
    %v508 = vrot.slane %v505, 1
    %v511 = vadd.f32 %v479, %v505
    %v512 = vadd.f32 %v480, %v508
    %v513 = vmul.f32 %v511, %v39
    %v514 = vmul.f32 %v512, %v39
    %v515 = vtanh.pop %v513
    %v516 = vtanh.pop %v514
    %v517 = vmul.f32 %v515, %v39
    %v518 = vmul.f32 %v516, %v39
    %v519 = vadd.f32 %v517, %v40
    %v520 = vadd.f32 %v518, %v40
    %v521 = vmul.f32 %v519, %v455
    %v522 = vmul.f32 %v520, %v456
    %525 = vrot.lane.b32.xlu0 %v519, 64
    %v526 = vpop.permute.xlu0 %525
    %527 = vrot.lane.b32.xlu0 %v520, 64
    %v528 = vpop.permute.xlu0 %527
    %v531 = vmul.f32 %v519, %v526
    %v532 = vmul.f32 %v520, %v528
    %535 = vrot.lane.b32.xlu0 %v531, 32
    %v536 = vpop.permute.xlu0 %535
    %537 = vrot.lane.b32.xlu0 %v532, 32
    %v538 = vpop.permute.xlu0 %537
    %v541 = vadd.f32 %v521, %v536
    %v542 = vadd.f32 %v522, %v538
    %v543 = vtanh.pop %v541
    %v544 = vtanh.pop %v542
    %547 = vrot.lane.b32.xlu0 %v543, 64
    %v548 = vpop.permute.xlu0 %547
    %549 = vrot.lane.b32.xlu0 %v544, 64
    %v550 = vpop.permute.xlu0 %549
    %v553 = vmul.f32 %v519, %v548
    %v554 = vmul.f32 %v520, %v550
    %557 = vrot.lane.b32.xlu0 %v553, 32
    %v558 = vpop.permute.xlu0 %557
    %559 = vrot.lane.b32.xlu0 %v554, 32
    %v560 = vpop.permute.xlu0 %559
    %563 = vst.msk [vmem:[#allocation2 + $0x5] sm:$0x1] %vm131, %v558
    %564 = vst.msk [vmem:[#allocation2 + $0xd] sm:$0x1] %vm131, %v560
    %v565 = vld [vmem:[%s0 + $0x6] sm:$0x1]
    %v566 = vld [vmem:[%s0 + $0xe] sm:$0x1]
    %v567 = vrot.slane %v554, 7
    %v568 = vsel %vm137, %v567, %v553
    %569 = vrot.lane.b32.xlu0 %v568, 32
    %v570 = vpop.permute.xlu0 %569
    %v571 = vsel %vm43, %v570, 0
    %573 = vmatpush.msra.mxu0 0.0
    %574 = vmatpush.msra.mxu0 0.0
    %575 = vmatpush.msra.mxu0 0.0
    %576 = vmatpush.msra.mxu0 0.0
    %577 = vmatpush.msra.mxu0 0.0
    %578 = vmatpush.msra.mxu0 0.0
    %579 = vmatpush.msra.mxu0 0.0
    %580 = vmatpush.msra.mxu0 0.0
    %581 = vmatpush.msra.mxu0 0.0
    %582 = vmatpush.msra.mxu0 0.0
    %583 = vmatpush.msra.mxu0 0.0
    %584 = vmatpush.msra.mxu0 0.0
    %585 = vmatpush.msra.mxu0 %v31
    %586 = vmatpush.msra.mxu0 %v30
    %587 = vmatpush.msra.mxu0 %v29
    %588 = vmatpush.msra.mxu0 %v28
    %589 = vmatmul.f32.gmra.mxu0 %v571
    %v590 = vpop.f32.mrf.mxu0
    %v591 = vadd.f32 0.0, %v590
    %592 = vdwg.mxu0
    %v594 = vrot.slane %v591, 1
    %v597 = vadd.f32 %v565, %v591
    %v598 = vadd.f32 %v566, %v594
    %v599 = vmul.f32 %v597, %v39
    %v600 = vmul.f32 %v598, %v39
    %v601 = vtanh.pop %v599
    %v602 = vtanh.pop %v600
    %v603 = vmul.f32 %v601, %v39
    %v604 = vmul.f32 %v602, %v39
    %v605 = vadd.f32 %v603, %v40
    %v606 = vadd.f32 %v604, %v40
    %v607 = vmul.f32 %v605, %v541
    %v608 = vmul.f32 %v606, %v542
    %611 = vrot.lane.b32.xlu0 %v605, 64
    %v612 = vpop.permute.xlu0 %611
    %613 = vrot.lane.b32.xlu0 %v606, 64
    %v614 = vpop.permute.xlu0 %613
    %v617 = vmul.f32 %v605, %v612
    %v618 = vmul.f32 %v606, %v614
    %621 = vrot.lane.b32.xlu0 %v617, 32
    %v622 = vpop.permute.xlu0 %621
    %623 = vrot.lane.b32.xlu0 %v618, 32
    %v624 = vpop.permute.xlu0 %623
    %v627 = vadd.f32 %v607, %v622
    %v628 = vadd.f32 %v608, %v624
    %v629 = vtanh.pop %v627
    %v630 = vtanh.pop %v628
    %633 = vrot.lane.b32.xlu0 %v629, 64
    %v634 = vpop.permute.xlu0 %633
    %635 = vrot.lane.b32.xlu0 %v630, 64
    %v636 = vpop.permute.xlu0 %635
    %v639 = vmul.f32 %v605, %v634
    %v640 = vmul.f32 %v606, %v636
    %643 = vrot.lane.b32.xlu0 %v639, 32
    %v644 = vpop.permute.xlu0 %643
    %645 = vrot.lane.b32.xlu0 %v640, 32
    %v646 = vpop.permute.xlu0 %645
    %649 = vst.msk [vmem:[#allocation2 + $0x6] sm:$0x1] %vm131, %v644
    %650 = vst.msk [vmem:[#allocation2 + $0xe] sm:$0x1] %vm131, %v646
    %v651 = vld [vmem:[%s0 + $0x7] sm:$0x1]
    %v652 = vld [vmem:[%s0 + $0xf] sm:$0x1]
    %v653 = vrot.slane %v640, 7
    %v654 = vsel %vm137, %v653, %v639
    %655 = vrot.lane.b32.xlu0 %v654, 32
    %v656 = vpop.permute.xlu0 %655
    %v657 = vsel %vm43, %v656, 0
    %659 = vmatpush.msra.mxu0 0.0
    %660 = vmatpush.msra.mxu0 0.0
    %661 = vmatpush.msra.mxu0 0.0
    %662 = vmatpush.msra.mxu0 0.0
    %663 = vmatpush.msra.mxu0 0.0
    %664 = vmatpush.msra.mxu0 0.0
    %665 = vmatpush.msra.mxu0 0.0
    %666 = vmatpush.msra.mxu0 0.0
    %667 = vmatpush.msra.mxu0 0.0
    %668 = vmatpush.msra.mxu0 0.0
    %669 = vmatpush.msra.mxu0 0.0
    %670 = vmatpush.msra.mxu0 0.0
    %671 = vmatpush.msra.mxu0 %v31
    %672 = vmatpush.msra.mxu0 %v30
    %673 = vmatpush.msra.mxu0 %v29
    %674 = vmatpush.msra.mxu0 %v28
    %675 = vmatmul.f32.gmra.mxu0 %v657
    %v676 = vpop.f32.mrf.mxu0
    %v677 = vadd.f32 0.0, %v676
    %678 = vdwg.mxu0
    %v680 = vrot.slane %v677, 1
    %v683 = vadd.f32 %v651, %v677
    %v684 = vadd.f32 %v652, %v680
    %v685 = vmul.f32 %v683, %v39
    %v686 = vmul.f32 %v684, %v39
    %v687 = vtanh.pop %v685
    %v688 = vtanh.pop %v686
    %v689 = vmul.f32 %v687, %v39
    %v690 = vmul.f32 %v688, %v39
    %v691 = vadd.f32 %v689, %v40
    %v692 = vadd.f32 %v690, %v40
    %v693 = vmul.f32 %v691, %v627
    %v694 = vmul.f32 %v692, %v628
    %697 = vrot.lane.b32.xlu0 %v691, 64
    %v698 = vpop.permute.xlu0 %697
    %699 = vrot.lane.b32.xlu0 %v692, 64
    %v700 = vpop.permute.xlu0 %699
    %v703 = vmul.f32 %v691, %v698
    %v704 = vmul.f32 %v692, %v700
    %707 = vrot.lane.b32.xlu0 %v703, 32
    %v708 = vpop.permute.xlu0 %707
    %709 = vrot.lane.b32.xlu0 %v704, 32
    %v710 = vpop.permute.xlu0 %709
    %v713 = vadd.f32 %v693, %v708
    %v714 = vadd.f32 %v694, %v710
    %v715 = vtanh.pop %v713
    %v716 = vtanh.pop %v714
    %719 = vrot.lane.b32.xlu0 %v715, 64
    %v720 = vpop.permute.xlu0 %719
    %721 = vrot.lane.b32.xlu0 %v716, 64
    %v722 = vpop.permute.xlu0 %721
    %v725 = vmul.f32 %v691, %v720
    %v726 = vmul.f32 %v692, %v722
    %729 = vrot.lane.b32.xlu0 %v725, 32
    %v730 = vpop.permute.xlu0 %729
    %731 = vrot.lane.b32.xlu0 %v726, 32
    %v732 = vpop.permute.xlu0 %731
    %735 = vst.msk [vmem:[#allocation2 + $0x7] sm:$0x1] %vm131, %v730
    %736 = vst.msk [vmem:[#allocation2 + $0xf] sm:$0x1] %vm131, %v732
    %v737 = vld [vmem:[#allocation2] sm:$0xff]
    %v738 = vld [vmem:[#allocation2 + $0x8] sm:$0xff]
    %v739 = vld [vmem:[%s4] sm:$0xff]
    %v740 = vld [vmem:[%s4 + $0x8] sm:$0xff]
    %v741 = vld [vmem:[%s4 + $0x10] sm:$0xff]
    %v742 = vld [vmem:[%s4 + $0x18] sm:$0xff]
    %v743 = vld [vmem:[%s5] sm:$0x1]
    %v745 = vperm.slane %v743, 0
    %v748 = vsel %vm43, %v737, 0
    %v751 = vsel %vm43, %v738, 0
    %753 = vmatpush.msra.mxu0 0.0
    %754 = vmatpush.msra.mxu0 0.0
    %755 = vmatpush.msra.mxu0 0.0
    %756 = vmatpush.msra.mxu0 0.0
    %757 = vmatpush.msra.mxu0 0.0
    %758 = vmatpush.msra.mxu0 0.0
    %759 = vmatpush.msra.mxu0 0.0
    %760 = vmatpush.msra.mxu0 0.0
    %761 = vmatpush.msra.mxu0 0.0
    %762 = vmatpush.msra.mxu0 0.0
    %763 = vmatpush.msra.mxu0 0.0
    %764 = vmatpush.msra.mxu0 0.0
    %765 = vmatpush.msra.mxu0 %v742
    %766 = vmatpush.msra.mxu0 %v741
    %767 = vmatpush.msra.mxu0 %v740
    %768 = vmatpush.msra.mxu0 %v739
    %769 = vmatmul.f32.gmra.mxu0 %v748
    %v770 = vpop.f32.mrf.mxu0
    %v771 = vadd.f32 %v745, %v770
    %772 = vmatmul.f32.gmra.mxu0 %v751
    %v773 = vpop.f32.mrf.mxu0
    %v774 = vadd.f32 %v745, %v773
    %775 = vdwg.mxu0
    %776 = vst.msk [vmem:[#allocation3] sm:$0xff] %vm43, %v771
    %777 = vst.msk [vmem:[#allocation3 + $0x8] sm:$0xff] %vm43, %v774
    %v778 = vrot.slane %v726, 7
    %v779 = vsel %vm137, %v778, %v725
    %780 = vrot.lane.b32.xlu0 %v779, 32
    %v781 = vpop.permute.xlu0 %780
    %vm783 = vcmask 254976
    %784 = vst.msk [vmem:[#allocation5] sm:$0x3] %vm783, %v781
    %v787 = vrot.slane %v714, 7
    %v788 = vsel %vm137, %v787, %v713
    %789 = vrot.lane.b32.xlu0 %v788, 96
    %v790 = vpop.permute.xlu0 %789
    %792 = vst.msk [vmem:[#allocation7] sm:$0x3] %vm783, %v790
    // Predicated region
    $region26: #{char_lstm_forward.1} parent=1 // pred_check
      _
    $region27: #{char_lstm_forward.1} parent=1 // pred_check_branch
      %794 = sbr.rel (0) target = $region29
    $region28: #{char_lstm_forward.1} parent=1 // pred_region
      %796 = vsyncadd [#allocation4], 0
      %s797 = sshll.u32 [#allocation3], 4
      %s798 = int_to_ptr.vmem [resolvable:$true] %s797
      %s799 = sshll.u32 %s6, 4
      %s800 = int_to_ptr.hbm [resolvable:$true] %s799
      %805 = dma.vmem_to_hbm [thread:$0]  %s798, 256, %s800, [#allocation4], 128, 128, 8
    $region29: #{char_lstm_forward.1} parent=1 // pred_fallthru
      _
    // Predicated region
    $region30: #{char_lstm_forward.1} parent=1 // pred_check
      _
    $region31: #{char_lstm_forward.1} parent=1 // pred_check_branch
      %807 = sbr.rel (0) target = $region33
    $region32: #{char_lstm_forward.1} parent=1 // pred_region
      %809 = vsyncadd [#allocation6], 0
      %s811 = sshll.u32 [#allocation5], 4
      %s812 = int_to_ptr.vmem [resolvable:$true] %s811
      %s813 = sshll.u32 %s7, 4
      %s814 = int_to_ptr.hbm [resolvable:$true] %s813
      %816 = dma.vmem_to_hbm [thread:$0]  %s812, 32, %s814, [#allocation6]
    $region33: #{char_lstm_forward.1} parent=1 // pred_fallthru
      _
    // Predicated region
    $region34: #{char_lstm_forward.1} parent=1 // pred_check
      _
    $region35: #{char_lstm_forward.1} parent=1 // pred_check_branch
      %818 = sbr.rel (0) target = $region37
    $region36: #{char_lstm_forward.1} parent=1 // pred_region
      %820 = vsyncadd [#allocation6], 0
      %s822 = sshll.u32 [#allocation7], 4
      %s823 = int_to_ptr.vmem [resolvable:$true] %s822
      %s824 = sshll.u32 %s8, 4
      %s825 = int_to_ptr.hbm [resolvable:$true] %s824
      %827 = dma.vmem_to_hbm [thread:$0]  %s823, 32, %s825, [#allocation6]
    $region37: #{char_lstm_forward.1} parent=1 // pred_fallthru
      _
    // Predicated region
    $region38: #{char_lstm_forward.1} parent=1 // pred_check
      _
    $region39: #{char_lstm_forward.1} parent=1 // pred_check_branch
      %829 = sbr.rel (0) target = $region41
    $region40: #{char_lstm_forward.1} parent=1 // pred_region
      %831 = dma.done [#allocation4], 256
    $region41: #{char_lstm_forward.1} parent=1 // pred_fallthru
      _
    // Predicated region
    $region42: #{char_lstm_forward.1} parent=1 // pred_check
      _
    $region43: #{char_lstm_forward.1} parent=1 // pred_check_branch
      %833 = sbr.rel (0) target = $region45
    $region44: #{char_lstm_forward.1} parent=1 // pred_region
      %835 = dma.done [#allocation6], 32
    $region45: #{char_lstm_forward.1} parent=1 // pred_fallthru
      _
    // Predicated region
    $region46: #{char_lstm_forward.1} parent=1 // pred_check
      _
    $region47: #{char_lstm_forward.1} parent=1 // pred_check_branch
      %837 = sbr.rel (0) target = $region49
    $region48: #{char_lstm_forward.1} parent=1 // pred_region
      %839 = dma.done [#allocation6], 32
    $region49: #{char_lstm_forward.1} parent=1 // pred_fallthru
      _
    %840 = vsyncpa [#allocation4], 1
    %841 = vsyncpa [#allocation6], 1

</llo_original>
